<compile_context>
chip_gen: v5e
topology: v5e:2x2
jax: 0.10.0
libtpu: 0.0.40
codegen_flags: <defaults>
</compile_context>

<pallas_src>
import functools

import jax
import jax.numpy as jnp
from jax.experimental import pallas as pl
from jax.experimental.pallas import tpu as pltpu

LANE = 128  # TPU vreg lane width


def _round_up(x: int, m: int) -> int:
    return ((x + m - 1) // m) * m


def _pad2d(a, rows: int, cols: int):
    return jnp.pad(a, ((0, rows - a.shape[0]), (0, cols - a.shape[1])))


def _policy_kernel(obs_ref, w1_ref, b1_ref, w2_ref, b2_ref, w3_ref, b3_ref,
                   out_ref):
    # Compute dtype fed to the MXU (f32 or bf16); accumulation is always f32.
    cd = w1_ref.dtype

    # Layer 1: Linear(state_dim -> H) + ReLU   (H = hidden padded to 128 lanes)
    h = jnp.dot(obs_ref[...], w1_ref[...],
                preferred_element_type=jnp.float32) + b1_ref[...]
    h = jnp.maximum(h, 0.0)

    # Layer 2: Linear(H -> H) + ReLU
    h = jnp.dot(h.astype(cd), w2_ref[...],
                preferred_element_type=jnp.float32) + b2_ref[...]
    h = jnp.maximum(h, 0.0)

    # Layer 3: Linear(H -> A) + Tanh   (A = act_dim padded to 128 lanes)
    h = jnp.dot(h.astype(cd), w3_ref[...],
                preferred_element_type=jnp.float32) + b3_ref[...]
    out_ref[...] = jnp.tanh(h).astype(out_ref.dtype)


@functools.partial(jax.jit, static_argnames=("use_bf16",))
def deterministic_policy_forward(obs, params, *, use_bf16: bool = False):
    """obs: (B, state_dim) f32. params: dict of W/b arrays. Returns (B, act_dim) f32."""
    w1, b1, w2, b2, w3, b3 = (params["w1"], params["b1"], params["w2"],
                              params["b2"], params["w3"], params["b3"])
    B, state_dim = obs.shape
    hidden = w1.shape[1]
    act_dim = w3.shape[1]

    # Lane-dense padded feature dims (zero padding keeps results exact:
    # padded hidden lanes stay 0 through relu, padded output lanes are sliced off).
    H = _round_up(max(hidden, LANE), LANE)
    A = _round_up(max(act_dim, LANE), LANE)

    compute_dtype = jnp.bfloat16 if use_bf16 else jnp.float32

    w1p = _pad2d(w1, state_dim, H).astype(compute_dtype)
    b1p = _pad2d(b1, 1, H).astype(jnp.float32)
    w2p = _pad2d(w2, H, H).astype(compute_dtype)
    b2p = _pad2d(b2, 1, H).astype(jnp.float32)
    w3p = _pad2d(w3, H, A).astype(compute_dtype)
    b3p = _pad2d(b3, 1, A).astype(jnp.float32)

    # Batch tile: large (512) when the batch is large so DMA/step overhead is
    # amortized; for small batches just round up to the sublane multiple (8).
    TB = min(512, _round_up(B, 8))
    B_pad = _round_up(B, TB)
    obs_p = jnp.pad(obs, ((0, B_pad - B), (0, 0))).astype(compute_dtype)

    grid = (B_pad // TB,)

    itemsize = jnp.dtype(compute_dtype).itemsize
    param_bytes = (w1p.size + w2p.size + w3p.size) * itemsize + \
                  (b1p.size + b2p.size + b3p.size) * 4
    cost = pl.CostEstimate(
        flops=2 * B * (state_dim * hidden + hidden * hidden + hidden * act_dim),
        transcendentals=B * act_dim,
        bytes_accessed=B * state_dim * itemsize + B * act_dim * 4 + param_bytes,
    )

    out_p = pl.pallas_call(
        _policy_kernel,
        out_shape=jax.ShapeDtypeStruct((B_pad, A), jnp.float32),
        grid=grid,
        in_specs=[
            pl.BlockSpec((TB, state_dim), lambda i: (i, 0)),   # streamed obs tile
            pl.BlockSpec((state_dim, H), lambda i: (0, 0)),    # resident weights
            pl.BlockSpec((1, H), lambda i: (0, 0)),
            pl.BlockSpec((H, H), lambda i: (0, 0)),
            pl.BlockSpec((1, H), lambda i: (0, 0)),
            pl.BlockSpec((H, A), lambda i: (0, 0)),
            pl.BlockSpec((1, A), lambda i: (0, 0)),
        ],
        out_specs=pl.BlockSpec((TB, A), lambda i: (i, 0)),     # lane-dense store
        compiler_params=pltpu.CompilerParams(
            dimension_semantics=("parallel",),                 # megacore on v7x
            vmem_limit_bytes=32 * 1024 * 1024,                 # portable to v7x (64 MiB VMEM)
        ),
        cost_estimate=cost,
    )(obs_p, w1p, b1p, w2p, b2p, w3p, b3p)

    return out_p[:B, :act_dim]


def init_params(key, state_dim, act_dim, hidden_dim):
    """Init mimicking nn.Linear default (uniform +-1/sqrt(fan_in)).

    Weights stored as (in, out) = transpose of PyTorch's (out, in) layout.
    """
    ks = jax.random.split(key, 6)

    def linear(kw, kb, fan_in, fan_out):
        bound = 1.0 / jnp.sqrt(jnp.float32(fan_in))
        w = jax.random.uniform(kw, (fan_in, fan_out), jnp.float32,
                               minval=-bound, maxval=bound)
        b = jax.random.uniform(kb, (1, fan_out), jnp.float32,
                               minval=-bound, maxval=bound)
        return w, b

    w1, b1 = linear(ks[0], ks[1], state_dim, hidden_dim)
    w2, b2 = linear(ks[2], ks[3], hidden_dim, hidden_dim)
    w3, b3 = linear(ks[4], ks[5], hidden_dim, act_dim)
    return {"w1": w1, "b1": b1, "w2": w2, "b2": b2, "w3": w3, "b3": b3}


def reference_forward(obs, p):
    h = jnp.maximum(obs @ p["w1"] + p["b1"], 0.0)
    h = jnp.maximum(h @ p["w2"] + p["b2"], 0.0)
    return jnp.tanh(h @ p["w3"] + p["b3"])


if __name__ == "__main__":
    # Small shapes consistent with the module: obs (batch, state_dim).
    batch, state_dim, act_dim, hidden_dim = 4, 16, 8, 32

    key = jax.random.PRNGKey(0)
    k_obs, k_params = jax.random.split(key)
    obs = jax.random.normal(k_obs, (batch, state_dim), dtype=jnp.float32)
    params = init_params(k_params, state_dim, act_dim, hidden_dim)

    out = deterministic_policy_forward(obs, params)
    out = jax.block_until_ready(out)

    ref = reference_forward(obs, params)
    assert out.shape == (batch, act_dim)
    assert jnp.allclose(out, ref, atol=1e-5, rtol=1e-5)

    # Also exercise a batch that is not a multiple of the tile size.
    big_obs = jax.random.normal(k_obs, (1000, state_dim), dtype=jnp.float32)
    big_out = jax.block_until_ready(deterministic_policy_forward(big_obs, params))
    assert big_out.shape == (1000, act_dim)
    assert jnp.allclose(big_out, reference_forward(big_obs, params),
                        atol=1e-5, rtol=1e-5)

    print("KERNEL_OK")
</pallas_src>

<mosaic_0001>
module attributes {stable_mosaic.version = 11 : i64} {
  func.func @_policy_kernel(%arg0: i32, %arg1: memref<8x16xf32, #tpu.memory_space<vmem>>, %arg2: memref<16x128xf32, #tpu.memory_space<vmem>>, %arg3: memref<1x128xf32, #tpu.memory_space<vmem>>, %arg4: memref<128x128xf32, #tpu.memory_space<vmem>>, %arg5: memref<1x128xf32, #tpu.memory_space<vmem>>, %arg6: memref<128x128xf32, #tpu.memory_space<vmem>>, %arg7: memref<1x128xf32, #tpu.memory_space<vmem>>, %arg8: memref<8x128xf32, #tpu.memory_space<vmem>>) attributes {dimension_semantics = [#tpu.dimension_semantics<parallel>], iteration_bounds = array<i64: 1>, scalar_prefetch = 0 : i64, scratch_operands = 0 : i64, tpu.core_type = #tpu.core_type<tc>, window_params = [{transform_indices = @transform_0, window_bounds = array<i64: 8, 16>}, {pipeline_mode = #tpu.pipeline_mode<synchronous>, transform_indices = @transform_1, window_bounds = array<i64: 16, 128>}, {pipeline_mode = #tpu.pipeline_mode<synchronous>, transform_indices = @transform_2, window_bounds = array<i64: 1, 128>}, {pipeline_mode = #tpu.pipeline_mode<synchronous>, transform_indices = @transform_3, window_bounds = array<i64: 128, 128>}, {pipeline_mode = #tpu.pipeline_mode<synchronous>, transform_indices = @transform_4, window_bounds = array<i64: 1, 128>}, {pipeline_mode = #tpu.pipeline_mode<synchronous>, transform_indices = @transform_5, window_bounds = array<i64: 128, 128>}, {pipeline_mode = #tpu.pipeline_mode<synchronous>, transform_indices = @transform_6, window_bounds = array<i64: 1, 128>}, {transform_indices = @transform_7, window_bounds = array<i64: 8, 128>}]} {
    %c0 = arith.constant 0 : index
    %c0_0 = arith.constant 0 : index
    %0 = vector.load %arg1[%c0, %c0_0] : memref<8x16xf32, #tpu.memory_space<vmem>>, vector<8x16xf32>
    %c0_1 = arith.constant 0 : index
    %c0_2 = arith.constant 0 : index
    %1 = vector.load %arg2[%c0_1, %c0_2] : memref<16x128xf32, #tpu.memory_space<vmem>>, vector<16x128xf32>
    %cst = arith.constant dense<0.000000e+00> : vector<8x128xf32>
    %2 = tpu.matmul %0, %1, %cst {dimension_numbers = #tpu.dot_dimension_numbers<[1], [0], [0], [1], [0, 0, 1, 1], [], []>} : vector<8x16xf32>, vector<16x128xf32>, vector<8x128xf32> -> vector<8x128xf32>
    %c0_3 = arith.constant 0 : index
    %c0_4 = arith.constant 0 : index
    %3 = vector.load %arg3[%c0_3, %c0_4] : memref<1x128xf32, #tpu.memory_space<vmem>>, vector<1x128xf32>
    %4 = vector.broadcast %3 : vector<1x128xf32> to vector<8x128xf32>
    %5 = arith.addf %2, %4 : vector<8x128xf32>
    %cst_5 = arith.constant 0.000000e+00 : f32
    %6 = vector.broadcast %cst_5 : f32 to vector<8x128xf32>
    %7 = arith.maximumf %5, %6 : vector<8x128xf32>
    %c0_6 = arith.constant 0 : index
    %c0_7 = arith.constant 0 : index
    %8 = vector.load %arg4[%c0_6, %c0_7] : memref<128x128xf32, #tpu.memory_space<vmem>>, vector<128x128xf32>
    %cst_8 = arith.constant dense<0.000000e+00> : vector<8x128xf32>
    %9 = tpu.matmul %7, %8, %cst_8 {dimension_numbers = #tpu.dot_dimension_numbers<[1], [0], [0], [1], [0, 0, 1, 1], [], []>} : vector<8x128xf32>, vector<128x128xf32>, vector<8x128xf32> -> vector<8x128xf32>
    %c0_9 = arith.constant 0 : index
    %c0_10 = arith.constant 0 : index
    %10 = vector.load %arg5[%c0_9, %c0_10] : memref<1x128xf32, #tpu.memory_space<vmem>>, vector<1x128xf32>
    %11 = vector.broadcast %10 : vector<1x128xf32> to vector<8x128xf32>
    %12 = arith.addf %9, %11 : vector<8x128xf32>
    %cst_11 = arith.constant 0.000000e+00 : f32
    %13 = vector.broadcast %cst_11 : f32 to vector<8x128xf32>
    %14 = arith.maximumf %12, %13 : vector<8x128xf32>
    %c0_12 = arith.constant 0 : index
    %c0_13 = arith.constant 0 : index
    %15 = vector.load %arg6[%c0_12, %c0_13] : memref<128x128xf32, #tpu.memory_space<vmem>>, vector<128x128xf32>
    %cst_14 = arith.constant dense<0.000000e+00> : vector<8x128xf32>
    %16 = tpu.matmul %14, %15, %cst_14 {dimension_numbers = #tpu.dot_dimension_numbers<[1], [0], [0], [1], [0, 0, 1, 1], [], []>} : vector<8x128xf32>, vector<128x128xf32>, vector<8x128xf32> -> vector<8x128xf32>
    %c0_15 = arith.constant 0 : index
    %c0_16 = arith.constant 0 : index
    %17 = vector.load %arg7[%c0_15, %c0_16] : memref<1x128xf32, #tpu.memory_space<vmem>>, vector<1x128xf32>
    %18 = vector.broadcast %17 : vector<1x128xf32> to vector<8x128xf32>
    %19 = arith.addf %16, %18 : vector<8x128xf32>
    %20 = math.tanh %19 : vector<8x128xf32>
    %c0_17 = arith.constant 0 : index
    %c0_18 = arith.constant 0 : index
    %21 = vector.load %arg8[%c0_17, %c0_18] : memref<8x128xf32, #tpu.memory_space<vmem>>, vector<8x128xf32>
    tpu.vector_store %arg8[%c0_17, %c0_18], %20 {strides = array<i32>} : memref<8x128xf32, #tpu.memory_space<vmem>>, vector<8x128xf32>,
    return
  }
  func.func @transform_0(%arg0: i32) -> (i32, i32) {
    %c0_i32 = arith.constant 0 : i32
    %c0_i32_0 = arith.constant 0 : i32
    return %arg0, %c0_i32 : i32, i32
  }
  func.func @transform_1(%arg0: i32) -> (i32, i32) {
    %c0_i32 = arith.constant 0 : i32
    %c0_i32_0 = arith.constant 0 : i32
    %c0_i32_1 = arith.constant 0 : i32
    return %c0_i32, %c0_i32_0 : i32, i32
  }
  func.func @transform_2(%arg0: i32) -> (i32, i32) {
    %c0_i32 = arith.constant 0 : i32
    %c0_i32_0 = arith.constant 0 : i32
    %c0_i32_1 = arith.constant 0 : i32
    return %c0_i32, %c0_i32_0 : i32, i32
  }
  func.func @transform_3(%arg0: i32) -> (i32, i32) {
    %c0_i32 = arith.constant 0 : i32
    %c0_i32_0 = arith.constant 0 : i32
    %c0_i32_1 = arith.constant 0 : i32
    return %c0_i32, %c0_i32_0 : i32, i32
  }
  func.func @transform_4(%arg0: i32) -> (i32, i32) {
    %c0_i32 = arith.constant 0 : i32
    %c0_i32_0 = arith.constant 0 : i32
    %c0_i32_1 = arith.constant 0 : i32
    return %c0_i32, %c0_i32_0 : i32, i32
  }
  func.func @transform_5(%arg0: i32) -> (i32, i32) {
    %c0_i32 = arith.constant 0 : i32
    %c0_i32_0 = arith.constant 0 : i32
    %c0_i32_1 = arith.constant 0 : i32
    return %c0_i32, %c0_i32_0 : i32, i32
  }
  func.func @transform_6(%arg0: i32) -> (i32, i32) {
    %c0_i32 = arith.constant 0 : i32
    %c0_i32_0 = arith.constant 0 : i32
    %c0_i32_1 = arith.constant 0 : i32
    return %c0_i32, %c0_i32_0 : i32, i32
  }
  func.func @transform_7(%arg0: i32) -> (i32, i32) {
    %c0_i32 = arith.constant 0 : i32
    %c0_i32_0 = arith.constant 0 : i32
    return %arg0, %c0_i32 : i32, i32
  }
}

</mosaic_0001>

<llo_original>
// kernel: deterministic_policy_forward.1
$region0: #{deterministic_policy_forward.1}
  #allocation0 [shape = 'u32[]', space=smem, size = 0x4, offset = 0x4, fixed_abs, tag = 'smem constant byte address 0x4 - core index']
  #allocation1 [shape = 'u32[72,128]{1,0:T(1,128)}', space=vmem, size = 0x9000, scoped, tag = 'internal scratch']
  %s0 = inlined_call_operand.vmem [shape: f32[8,16], index: 0, kind: input, shape index: {}]
  %s1 = inlined_call_operand.vmem [shape: f32[16,128], index: 1, kind: input, shape index: {}]
  %s2 = inlined_call_operand.vmem [shape: f32[1,128], index: 2, kind: input, shape index: {}]
  %s3 = inlined_call_operand.vmem [shape: f32[128,128], index: 3, kind: input, shape index: {}]
  %s4 = inlined_call_operand.vmem [shape: f32[1,128], index: 4, kind: input, shape index: {}]
  %s5 = inlined_call_operand.vmem [shape: f32[128,128], index: 5, kind: input, shape index: {}]
  %s6 = inlined_call_operand.vmem [shape: f32[1,128], index: 6, kind: input, shape index: {}]
  %s7 = inlined_call_operand.vmem [shape: f32[8,128], index: 7, kind: output, shape index: {}]
  %s8 = sld [smem:[#allocation0]]
  $region38: #{deterministic_policy_forward.1} parent=0
    _
  %s10 = ssub.s32 1, %s8
  %s11 = scalar_select 0, %s10, %s8
  // Predicated region
  $region2: #{deterministic_policy_forward.1} parent=0 // pred_check
    _
  $region3: #{deterministic_policy_forward.1} parent=0 // pred_check_branch
    %13 = sbr.rel (0) target = $region5
  $region4: #{deterministic_policy_forward.1} parent=0 // pred_region
    _
  $region5: #{deterministic_policy_forward.1} parent=0 // pred_fallthru
    _
  // Predicated region
  $region6: #{deterministic_policy_forward.1} parent=0 // pred_check
    _
  $region7: #{deterministic_policy_forward.1} parent=0 // pred_check_branch
    %15 = sbr.rel (0) target = $region9
  $region8: #{deterministic_policy_forward.1} parent=0 // pred_region
    _
  $region9: #{deterministic_policy_forward.1} parent=0 // pred_fallthru
    _
  // Predicated region
  $region10: #{deterministic_policy_forward.1} parent=0 // pred_check
    _
  $region11: #{deterministic_policy_forward.1} parent=0 // pred_check_branch
    %17 = sbr.rel (0) target = $region13
  $region12: #{deterministic_policy_forward.1} parent=0 // pred_region
    _
  $region13: #{deterministic_policy_forward.1} parent=0 // pred_fallthru
    _
  // Predicated region
  $region14: #{deterministic_policy_forward.1} parent=0 // pred_check
    _
  $region15: #{deterministic_policy_forward.1} parent=0 // pred_check_branch
    %19 = sbr.rel (0) target = $region17
  $region16: #{deterministic_policy_forward.1} parent=0 // pred_region
    _
  $region17: #{deterministic_policy_forward.1} parent=0 // pred_fallthru
    _
  // Predicated region
  $region18: #{deterministic_policy_forward.1} parent=0 // pred_check
    _
  $region19: #{deterministic_policy_forward.1} parent=0 // pred_check_branch
    %21 = sbr.rel (0) target = $region21
  $region20: #{deterministic_policy_forward.1} parent=0 // pred_region
    _
  $region21: #{deterministic_policy_forward.1} parent=0 // pred_fallthru
    _
  // Predicated region
  $region22: #{deterministic_policy_forward.1} parent=0 // pred_check
    _
  $region23: #{deterministic_policy_forward.1} parent=0 // pred_check_branch
    %23 = sbr.rel (0) target = $region25
  $region24: #{deterministic_policy_forward.1} parent=0 // pred_region
    _
  $region25: #{deterministic_policy_forward.1} parent=0 // pred_fallthru
    _
  // Predicated region
  $region26: #{deterministic_policy_forward.1} parent=0 // pred_check
    _
  $region27: #{deterministic_policy_forward.1} parent=0 // pred_check_branch
    %25 = sbr.rel (0) target = $region29
  $region28: #{deterministic_policy_forward.1} parent=0 // pred_region
    _
  $region29: #{deterministic_policy_forward.1} parent=0 // pred_fallthru
    _
  %v26 = vld [vmem:[%s0] sm:$0xff]
  %v27 = vld [vmem:[%s1] sm:$0xff]
  %v28 = vld [vmem:[%s1 + $0x8] sm:$0xff]
  %v29 = vld [vmem:[%s2] sm:$0x1]
  %v31 = vperm.slane %v29, 0
  %vm33 = vcmask 130048
  %v35 = vsel %vm33, %v26, 0
  %37 = vmatpush.msra.mxu0 0.0
  %38 = vmatpush.msra.mxu0 0.0
  %39 = vmatpush.msra.mxu0 0.0
  %40 = vmatpush.msra.mxu0 0.0
  %41 = vmatpush.msra.mxu0 0.0
  %42 = vmatpush.msra.mxu0 0.0
  %43 = vmatpush.msra.mxu0 0.0
  %44 = vmatpush.msra.mxu0 0.0
  %45 = vmatpush.msra.mxu0 0.0
  %46 = vmatpush.msra.mxu0 0.0
  %47 = vmatpush.msra.mxu0 0.0
  %48 = vmatpush.msra.mxu0 0.0
  %49 = vmatpush.msra.mxu0 0.0
  %50 = vmatpush.msra.mxu0 0.0
  %51 = vmatpush.msra.mxu0 %v28
  %52 = vmatpush.msra.mxu0 %v27
  %53 = vmatmul.f32.gmra.mxu0 %v35
  %v54 = vpop.f32.mrf.mxu0
  %v55 = vadd.f32 %v31, %v54
  %56 = vdwg.mxu0
  %v57 = vmax.f32 %v55, 0.0
  %v58 = vld [vmem:[%s3] sm:$0xff]
  %v59 = vld [vmem:[%s3 + $0x8] sm:$0xff]
  %v60 = vld [vmem:[%s3 + $0x10] sm:$0xff]
  %v61 = vld [vmem:[%s3 + $0x18] sm:$0xff]
  %v62 = vld [vmem:[%s3 + $0x20] sm:$0xff]
  %v63 = vld [vmem:[%s3 + $0x28] sm:$0xff]
  %v64 = vld [vmem:[%s3 + $0x30] sm:$0xff]
  %v65 = vld [vmem:[%s3 + $0x38] sm:$0xff]
  %v66 = vld [vmem:[%s3 + $0x40] sm:$0xff]
  %v67 = vld [vmem:[%s3 + $0x48] sm:$0xff]
  %v68 = vld [vmem:[%s3 + $0x50] sm:$0xff]
  %v69 = vld [vmem:[%s3 + $0x58] sm:$0xff]
  %v70 = vld [vmem:[%s3 + $0x60] sm:$0xff]
  %v71 = vld [vmem:[%s3 + $0x68] sm:$0xff]
  %v72 = vld [vmem:[%s3 + $0x70] sm:$0xff]
  %v73 = vld [vmem:[%s3 + $0x78] sm:$0xff]
  %v74 = vld [vmem:[%s4] sm:$0x1]
  %v76 = vperm.slane %v74, 0
  %78 = vmatpush.msra.mxu0 %v73
  %79 = vmatpush.msra.mxu0 %v72
  %80 = vmatpush.msra.mxu0 %v71
  %81 = vmatpush.msra.mxu0 %v70
  %82 = vmatpush.msra.mxu0 %v69
  %83 = vmatpush.msra.mxu0 %v68
  %84 = vmatpush.msra.mxu0 %v67
  %85 = vmatpush.msra.mxu0 %v66
  %86 = vmatpush.msra.mxu0 %v65
  %87 = vmatpush.msra.mxu0 %v64
  %88 = vmatpush.msra.mxu0 %v63
  %89 = vmatpush.msra.mxu0 %v62
  %90 = vmatpush.msra.mxu0 %v61
  %91 = vmatpush.msra.mxu0 %v60
  %92 = vmatpush.msra.mxu0 %v59
  %93 = vmatpush.msra.mxu0 %v58
  %94 = vmatmul.f32.gmra.mxu0 %v57
  %v95 = vpop.f32.mrf.mxu0
  %v96 = vadd.f32 %v76, %v95
  %97 = vdwg.mxu0
  %v98 = vmax.f32 %v96, 0.0
  %v99 = vld [vmem:[%s5] sm:$0xff]
  %v100 = vld [vmem:[%s5 + $0x8] sm:$0xff]
  %v101 = vld [vmem:[%s5 + $0x10] sm:$0xff]
  %v102 = vld [vmem:[%s5 + $0x18] sm:$0xff]
  %v103 = vld [vmem:[%s5 + $0x20] sm:$0xff]
  %v104 = vld [vmem:[%s5 + $0x28] sm:$0xff]
  %v105 = vld [vmem:[%s5 + $0x30] sm:$0xff]
  %v106 = vld [vmem:[%s5 + $0x38] sm:$0xff]
  %v107 = vld [vmem:[%s5 + $0x40] sm:$0xff]
  %v108 = vld [vmem:[%s5 + $0x48] sm:$0xff]
  %v109 = vld [vmem:[%s5 + $0x50] sm:$0xff]
  %v110 = vld [vmem:[%s5 + $0x58] sm:$0xff]
  %v111 = vld [vmem:[%s5 + $0x60] sm:$0xff]
  %v112 = vld [vmem:[%s5 + $0x68] sm:$0xff]
  %v113 = vld [vmem:[%s5 + $0x70] sm:$0xff]
  %v114 = vld [vmem:[%s5 + $0x78] sm:$0xff]
  %v115 = vld [vmem:[%s6] sm:$0x1]
  %v117 = vperm.slane %v115, 0
  %119 = vmatpush.msra.mxu0 %v114
  %120 = vmatpush.msra.mxu0 %v113
  %121 = vmatpush.msra.mxu0 %v112
  %122 = vmatpush.msra.mxu0 %v111
  %123 = vmatpush.msra.mxu0 %v110
  %124 = vmatpush.msra.mxu0 %v109
  %125 = vmatpush.msra.mxu0 %v108
  %126 = vmatpush.msra.mxu0 %v107
  %127 = vmatpush.msra.mxu0 %v106
  %128 = vmatpush.msra.mxu0 %v105
  %129 = vmatpush.msra.mxu0 %v104
  %130 = vmatpush.msra.mxu0 %v103
  %131 = vmatpush.msra.mxu0 %v102
  %132 = vmatpush.msra.mxu0 %v101
  %133 = vmatpush.msra.mxu0 %v100
  %134 = vmatpush.msra.mxu0 %v99
  %135 = vmatmul.f32.gmra.mxu0 %v98
  %v136 = vpop.f32.mrf.mxu0
  %v137 = vadd.f32 %v117, %v136
  %138 = vdwg.mxu0
  %v139 = vtanh.pop %v137
  %140 = vst [vmem:[%s7] sm:$0xff] %v139
  // Predicated region
  $region30: #{deterministic_policy_forward.1} parent=0 // pred_check
    _
  $region31: #{deterministic_policy_forward.1} parent=0 // pred_check_branch
    %142 = sbr.rel (0) target = $region33
  $region32: #{deterministic_policy_forward.1} parent=0 // pred_region
    _
  $region33: #{deterministic_policy_forward.1} parent=0 // pred_fallthru
    _
  // Predicated region
  $region34: #{deterministic_policy_forward.1} parent=0 // pred_check
    _
  $region35: #{deterministic_policy_forward.1} parent=0 // pred_check_branch
    %144 = sbr.rel (0) target = $region37
  $region36: #{deterministic_policy_forward.1} parent=0 // pred_region
    _
  $region37: #{deterministic_policy_forward.1} parent=0 // pred_fallthru
    _

</llo_original>
